<compile_context>
chip_gen: v7x
topology: tpu7x:2x2x1
jax: 0.10.0
libtpu: 0.0.40
codegen_flags: <defaults>
</compile_context>

<pallas_src>
import functools

import jax
import jax.numpy as jnp
from jax.experimental import pallas as pl
from jax.experimental.pallas import tpu as pltpu

_LANE = 128


def _ccc_kernel(yp_ref, yt_ref, out_ref, acc_ref, *,
                n_elems, tr, rows, needs_mask):
    i = pl.program_id(0)

    @pl.when(i == 0)
    def _():
        acc_ref[...] = jnp.zeros_like(acc_ref)

    yp = yp_ref[...].astype(jnp.float32)
    yt = yt_ref[...].astype(jnp.float32)

    if needs_mask:
        # Mask rows of the last tile that over-run the (rows, 128) slab.
        row_ids = jax.lax.broadcasted_iota(jnp.int32, (tr, _LANE), 0) + i * tr
        valid = row_ids < rows
        zero = jnp.float32(0.0)
        yp = jnp.where(valid, yp, zero)
        yt = jnp.where(valid, yt, zero)

    # Pure-VPU accumulation: fold the tile's sublane groups into one (8, 128)
    # vreg-shaped partial sum per statistic (no cross-lane reduce in the loop).
    yp3 = yp.reshape(tr // 8, 8, _LANE)
    yt3 = yt.reshape(tr // 8, 8, _LANE)

    acc_ref[0] += jnp.sum(yp3, axis=0)
    acc_ref[1] += jnp.sum(yt3, axis=0)
    acc_ref[2] += jnp.sum(yp3 * yp3, axis=0)
    acc_ref[3] += jnp.sum(yt3 * yt3, axis=0)
    acc_ref[4] += jnp.sum(yp3 * yt3, axis=0)

    @pl.when(i == pl.num_programs(0) - 1)
    def _():
        n = jnp.float32(n_elems)
        sum_p = jnp.sum(acc_ref[0])
        sum_t = jnp.sum(acc_ref[1])
        sum_pp = jnp.sum(acc_ref[2])
        sum_tt = jnp.sum(acc_ref[3])
        sum_pt = jnp.sum(acc_ref[4])

        mean_p = sum_p / n
        mean_t = sum_t / n
        # unbiased variance (torch.var default): (sum_sq - n*mean^2) / (n - 1)
        var_p = (sum_pp - n * mean_p * mean_p) / (n - 1.0)
        var_t = (sum_tt - n * mean_t * mean_t) / (n - 1.0)
        # covariance with mean over N (torch.mean of the centered product)
        cov = sum_pt / n - mean_p * mean_t

        ccc = 2.0 * cov / (var_p + var_t + (mean_p - mean_t) ** 2)
        out_ref[0, 0] = jnp.float32(1.0) - ccc


def ccc_loss(y_pred, y_true, *, tile_rows=1024):
    """Pallas TPU implementation of CCCLoss.forward(y_pred, y_true)."""
    assert y_pred.shape == y_true.shape
    n_elems = int(y_pred.size)
    assert n_elems > 1, "unbiased variance needs at least 2 elements"

    rows = -(-n_elems // _LANE)          # cdiv
    padded = rows * _LANE

    # Keep native dtype (no f32 upcast in the wrapper -> half the HBM traffic
    # for bf16/f16 inputs); cast happens per-tile inside the kernel.
    yp = y_pred.reshape(-1)
    yt = y_true.reshape(-1)
    if padded != n_elems:
        # Zero-pad the ragged 128-tail; zeros contribute nothing to the sums.
        yp = jnp.pad(yp, (0, padded - n_elems))
        yt = jnp.pad(yt, (0, padded - n_elems))
    yp2d = yp.reshape(rows, _LANE)
    yt2d = yt.reshape(rows, _LANE)

    # Effective tile height: multiple of 8, no larger than the (rounded) slab.
    tr = max(8, (int(tile_rows) // 8) * 8)
    rows_r8 = ((rows + 7) // 8) * 8
    tr = min(tr, rows_r8)
    grid_steps = -(-rows // tr)
    needs_mask = (rows % tr) != 0        # last tile over-runs the slab

    kernel = functools.partial(
        _ccc_kernel,
        n_elems=float(n_elems), tr=tr, rows=rows, needs_mask=needs_mask)

    out = pl.pallas_call(
        kernel,
        out_shape=jax.ShapeDtypeStruct((1, 1), jnp.float32),
        grid_spec=pltpu.PrefetchScalarGridSpec(
            num_scalar_prefetch=0,
            grid=(grid_steps,),
            in_specs=[
                pl.BlockSpec((tr, _LANE), lambda i: (i, 0)),
                pl.BlockSpec((tr, _LANE), lambda i: (i, 0)),
            ],
            out_specs=pl.BlockSpec(
                (1, 1), lambda i: (0, 0),
                memory_space=pltpu.MemorySpace.SMEM),
            scratch_shapes=[pltpu.VMEM((5, 8, _LANE), jnp.float32)],
        ),
        compiler_params=pltpu.CompilerParams(
            dimension_semantics=("arbitrary",)),
    )(yp2d, yt2d)
    return out[0, 0]


def ccc_loss_ref(y_pred, y_true):
    """Pure-JAX reference matching the PyTorch module."""
    yp = y_pred.astype(jnp.float32).ravel()
    yt = y_true.astype(jnp.float32).ravel()
    mean_p = jnp.mean(yp)
    mean_t = jnp.mean(yt)
    var_p = jnp.var(yp, ddof=1)
    var_t = jnp.var(yt, ddof=1)
    cov = jnp.mean((yp - mean_p) * (yt - mean_t))
    ccc = 2 * cov / (var_p + var_t + (mean_p - mean_t) ** 2)
    return 1.0 - ccc


if __name__ == "__main__":
    key = jax.random.PRNGKey(0)

    # Main check: small shape consistent with a regression head (batch, C, H, W).
    k1, k2 = jax.random.split(key)
    shape = (2, 4, 16, 16)  # 2048 elements -> (16, 128) slab, single tile
    y_pred = jax.random.normal(k1, shape, dtype=jnp.float32)
    y_true = 0.7 * y_pred + 0.3 * jax.random.normal(k2, shape, dtype=jnp.float32)

    loss = jax.block_until_ready(ccc_loss(y_pred, y_true))
    ref = ccc_loss_ref(y_pred, y_true)
    assert jnp.allclose(loss, ref, rtol=1e-5, atol=1e-5), (loss, ref)

    # Ragged size: exercises zero-padding of the 128-tail + row masking.
    k3, k4 = jax.random.split(k1)
    yp_r = jax.random.normal(k3, (3, 5, 7, 11), dtype=jnp.float32)     # 1155 elems
    yt_r = 0.5 * yp_r + 0.5 * jax.random.normal(k4, (3, 5, 7, 11), dtype=jnp.float32)
    loss_r = jax.block_until_ready(ccc_loss(yp_r, yt_r))
    ref_r = ccc_loss_ref(yp_r, yt_r)
    assert jnp.allclose(loss_r, ref_r, rtol=1e-5, atol=1e-5), (loss_r, ref_r)

    # Multi-tile grid + native bf16 inputs (no wrapper upcast).
    k5, k6 = jax.random.split(k2)
    yp_b = jax.random.normal(k5, (4, 8, 64, 128), dtype=jnp.bfloat16)  # rows=2048
    yt_b = (0.8 * yp_b.astype(jnp.float32)
            + 0.2 * jax.random.normal(k6, (4, 8, 64, 128), dtype=jnp.float32)
            ).astype(jnp.bfloat16)
    loss_b = jax.block_until_ready(ccc_loss(yp_b, yt_b, tile_rows=1024))
    ref_b = ccc_loss_ref(yp_b, yt_b)
    assert jnp.allclose(loss_b, ref_b, rtol=2e-3, atol=2e-3), (loss_b, ref_b)

    print("KERNEL_OK")
</pallas_src>

<mosaic_0001>
module attributes {stable_mosaic.version = 11 : i64} {
  func.func @_ccc_kernel(%arg0: i32, %arg1: memref<16x128xf32, #tpu.memory_space<vmem>>, %arg2: memref<16x128xf32, #tpu.memory_space<vmem>>, %arg3: memref<1x1xf32, #tpu.memory_space<smem>>, %arg4: memref<5x8x128xf32, #tpu.memory_space<vmem>>) attributes {dimension_semantics = [#tpu.dimension_semantics<arbitrary>], iteration_bounds = array<i64: 1>, scalar_prefetch = 0 : i64, scratch_operands = 1 : i64, tpu.core_type = #tpu.core_type<tc>, window_params = [{transform_indices = @transform_0, window_bounds = array<i64: 16, 128>}, {transform_indices = @transform_1, window_bounds = array<i64: 16, 128>}, {transform_indices = @transform_2, window_bounds = array<i64: 1, 1>}]} {
    %c0_i32 = arith.constant 0 : i32
    %0 = arith.cmpi eq, %arg0, %c0_i32 : i32
    %1 = arith.extui %0 : i1 to i32
    %c0_i32_0 = arith.constant 0 : i32
    %2 = arith.cmpi ne, %1, %c0_i32_0 : i32
    scf.if %2 {
      %cst_36 = arith.constant 0.000000e+00 : f32
      %48 = vector.broadcast %cst_36 : f32 to vector<5x8x128xf32>
      %c0_37 = arith.constant 0 : index
      %c0_38 = arith.constant 0 : index
      %c0_39 = arith.constant 0 : index
      %49 = vector.load %arg4[%c0_37, %c0_38, %c0_39] : memref<5x8x128xf32, #tpu.memory_space<vmem>>, vector<5x8x128xf32>
      tpu.vector_store %arg4[%c0_37, %c0_38, %c0_39], %48 {strides = array<i32>} : memref<5x8x128xf32, #tpu.memory_space<vmem>>, vector<5x8x128xf32>,
    } else {
    }
    %c0 = arith.constant 0 : index
    %c0_1 = arith.constant 0 : index
    %3 = vector.load %arg1[%c0, %c0_1] : memref<16x128xf32, #tpu.memory_space<vmem>>, vector<16x128xf32>
    %c0_2 = arith.constant 0 : index
    %c0_3 = arith.constant 0 : index
    %4 = vector.load %arg2[%c0_2, %c0_3] : memref<16x128xf32, #tpu.memory_space<vmem>>, vector<16x128xf32>
    %5 = vector.shape_cast %3 : vector<16x128xf32> to vector<2x8x128xf32>
    %6 = vector.shape_cast %4 : vector<16x128xf32> to vector<2x8x128xf32>
    %c0_4 = arith.constant 0 : index
    %c0_5 = arith.constant 0 : index
    %c0_6 = arith.constant 0 : index
    %7 = vector.load %arg4[%c0_4, %c0_5, %c0_6] : memref<5x8x128xf32, #tpu.memory_space<vmem>>, vector<1x8x128xf32>
    %8 = vector.shape_cast %7 : vector<1x8x128xf32> to vector<8x128xf32>
    %cst = arith.constant dense<0.000000e+00> : vector<8x128xf32>
    %9 = vector.multi_reduction <add>, %5, %cst [0] : vector<2x8x128xf32> to vector<8x128xf32>
    %10 = arith.addf %8, %9 : vector<8x128xf32>
    %c0_7 = arith.constant 0 : index
    %c0_8 = arith.constant 0 : index
    %c0_9 = arith.constant 0 : index
    %11 = vector.load %arg4[%c0_7, %c0_8, %c0_9] : memref<5x8x128xf32, #tpu.memory_space<vmem>>, vector<1x8x128xf32>
    %12 = vector.shape_cast %11 : vector<1x8x128xf32> to vector<8x128xf32>
    %13 = vector.shape_cast %10 : vector<8x128xf32> to vector<1x8x128xf32>
    tpu.vector_store %arg4[%c0_7, %c0_8, %c0_9], %13 {strides = array<i32>} : memref<5x8x128xf32, #tpu.memory_space<vmem>>, vector<1x8x128xf32>,
    %c1 = arith.constant 1 : index
    %c0_10 = arith.constant 0 : index
    %c0_11 = arith.constant 0 : index
    %14 = vector.load %arg4[%c1, %c0_10, %c0_11] : memref<5x8x128xf32, #tpu.memory_space<vmem>>, vector<1x8x128xf32>
    %15 = vector.shape_cast %14 : vector<1x8x128xf32> to vector<8x128xf32>
    %cst_12 = arith.constant dense<0.000000e+00> : vector<8x128xf32>
    %16 = vector.multi_reduction <add>, %6, %cst_12 [0] : vector<2x8x128xf32> to vector<8x128xf32>
    %17 = arith.addf %15, %16 : vector<8x128xf32>
    %c1_13 = arith.constant 1 : index
    %c0_14 = arith.constant 0 : index
    %c0_15 = arith.constant 0 : index
    %18 = vector.load %arg4[%c1_13, %c0_14, %c0_15] : memref<5x8x128xf32, #tpu.memory_space<vmem>>, vector<1x8x128xf32>
    %19 = vector.shape_cast %18 : vector<1x8x128xf32> to vector<8x128xf32>
    %20 = vector.shape_cast %17 : vector<8x128xf32> to vector<1x8x128xf32>
    tpu.vector_store %arg4[%c1_13, %c0_14, %c0_15], %20 {strides = array<i32>} : memref<5x8x128xf32, #tpu.memory_space<vmem>>, vector<1x8x128xf32>,
    %c2 = arith.constant 2 : index
    %c0_16 = arith.constant 0 : index
    %c0_17 = arith.constant 0 : index
    %21 = vector.load %arg4[%c2, %c0_16, %c0_17] : memref<5x8x128xf32, #tpu.memory_space<vmem>>, vector<1x8x128xf32>
    %22 = vector.shape_cast %21 : vector<1x8x128xf32> to vector<8x128xf32>
    %23 = arith.mulf %5, %5 : vector<2x8x128xf32>
    %cst_18 = arith.constant dense<0.000000e+00> : vector<8x128xf32>
    %24 = vector.multi_reduction <add>, %23, %cst_18 [0] : vector<2x8x128xf32> to vector<8x128xf32>
    %25 = arith.addf %22, %24 : vector<8x128xf32>
    %c2_19 = arith.constant 2 : index
    %c0_20 = arith.constant 0 : index
    %c0_21 = arith.constant 0 : index
    %26 = vector.load %arg4[%c2_19, %c0_20, %c0_21] : memref<5x8x128xf32, #tpu.memory_space<vmem>>, vector<1x8x128xf32>
    %27 = vector.shape_cast %26 : vector<1x8x128xf32> to vector<8x128xf32>
    %28 = vector.shape_cast %25 : vector<8x128xf32> to vector<1x8x128xf32>
    tpu.vector_store %arg4[%c2_19, %c0_20, %c0_21], %28 {strides = array<i32>} : memref<5x8x128xf32, #tpu.memory_space<vmem>>, vector<1x8x128xf32>,
    %c3 = arith.constant 3 : index
    %c0_22 = arith.constant 0 : index
    %c0_23 = arith.constant 0 : index
    %29 = vector.load %arg4[%c3, %c0_22, %c0_23] : memref<5x8x128xf32, #tpu.memory_space<vmem>>, vector<1x8x128xf32>
    %30 = vector.shape_cast %29 : vector<1x8x128xf32> to vector<8x128xf32>
    %31 = arith.mulf %6, %6 : vector<2x8x128xf32>
    %cst_24 = arith.constant dense<0.000000e+00> : vector<8x128xf32>
    %32 = vector.multi_reduction <add>, %31, %cst_24 [0] : vector<2x8x128xf32> to vector<8x128xf32>
    %33 = arith.addf %30, %32 : vector<8x128xf32>
    %c3_25 = arith.constant 3 : index
    %c0_26 = arith.constant 0 : index
    %c0_27 = arith.constant 0 : index
    %34 = vector.load %arg4[%c3_25, %c0_26, %c0_27] : memref<5x8x128xf32, #tpu.memory_space<vmem>>, vector<1x8x128xf32>
    %35 = vector.shape_cast %34 : vector<1x8x128xf32> to vector<8x128xf32>
    %36 = vector.shape_cast %33 : vector<8x128xf32> to vector<1x8x128xf32>
    tpu.vector_store %arg4[%c3_25, %c0_26, %c0_27], %36 {strides = array<i32>} : memref<5x8x128xf32, #tpu.memory_space<vmem>>, vector<1x8x128xf32>,
    %c4 = arith.constant 4 : index
    %c0_28 = arith.constant 0 : index
    %c0_29 = arith.constant 0 : index
    %37 = vector.load %arg4[%c4, %c0_28, %c0_29] : memref<5x8x128xf32, #tpu.memory_space<vmem>>, vector<1x8x128xf32>
    %38 = vector.shape_cast %37 : vector<1x8x128xf32> to vector<8x128xf32>
    %39 = arith.mulf %5, %6 : vector<2x8x128xf32>
    %cst_30 = arith.constant dense<0.000000e+00> : vector<8x128xf32>
    %40 = vector.multi_reduction <add>, %39, %cst_30 [0] : vector<2x8x128xf32> to vector<8x128xf32>
    %41 = arith.addf %38, %40 : vector<8x128xf32>
    %c4_31 = arith.constant 4 : index
    %c0_32 = arith.constant 0 : index
    %c0_33 = arith.constant 0 : index
    %42 = vector.load %arg4[%c4_31, %c0_32, %c0_33] : memref<5x8x128xf32, #tpu.memory_space<vmem>>, vector<1x8x128xf32>
    %43 = vector.shape_cast %42 : vector<1x8x128xf32> to vector<8x128xf32>
    %44 = vector.shape_cast %41 : vector<8x128xf32> to vector<1x8x128xf32>
    tpu.vector_store %arg4[%c4_31, %c0_32, %c0_33], %44 {strides = array<i32>} : memref<5x8x128xf32, #tpu.memory_space<vmem>>, vector<1x8x128xf32>,
    %c0_i32_34 = arith.constant 0 : i32
    %45 = arith.cmpi eq, %arg0, %c0_i32_34 : i32
    %46 = arith.extui %45 : i1 to i32
    %c0_i32_35 = arith.constant 0 : i32
    %47 = arith.cmpi ne, %46, %c0_i32_35 : i32
    scf.if %47 {
      %c0_36 = arith.constant 0 : index
      %c0_37 = arith.constant 0 : index
      %c0_38 = arith.constant 0 : index
      %48 = vector.load %arg4[%c0_36, %c0_37, %c0_38] : memref<5x8x128xf32, #tpu.memory_space<vmem>>, vector<1x8x128xf32>
      %49 = vector.shape_cast %48 : vector<1x8x128xf32> to vector<8x128xf32>
      %50 = vector.shape_cast %49 : vector<8x128xf32> to vector<1x8x128xf32>
      %cst_39 = arith.constant dense<0.000000e+00> : vector<1xf32>
      %51 = vector.multi_reduction <add>, %50, %cst_39 [1, 2] : vector<1x8x128xf32> to vector<1xf32>
      %52 = vector.shape_cast %51 : vector<1xf32> to vector<1x1x1xf32>
      %53 = vector.extract %52[0, 0, 0] : f32 from vector<1x1x1xf32>
      %c1_40 = arith.constant 1 : index
      %c0_41 = arith.constant 0 : index
      %c0_42 = arith.constant 0 : index
      %54 = vector.load %arg4[%c1_40, %c0_41, %c0_42] : memref<5x8x128xf32, #tpu.memory_space<vmem>>, vector<1x8x128xf32>
      %55 = vector.shape_cast %54 : vector<1x8x128xf32> to vector<8x128xf32>
      %56 = vector.shape_cast %55 : vector<8x128xf32> to vector<1x8x128xf32>
      %cst_43 = arith.constant dense<0.000000e+00> : vector<1xf32>
      %57 = vector.multi_reduction <add>, %56, %cst_43 [1, 2] : vector<1x8x128xf32> to vector<1xf32>
      %58 = vector.shape_cast %57 : vector<1xf32> to vector<1x1x1xf32>
      %59 = vector.extract %58[0, 0, 0] : f32 from vector<1x1x1xf32>
      %c2_44 = arith.constant 2 : index
      %c0_45 = arith.constant 0 : index
      %c0_46 = arith.constant 0 : index
      %60 = vector.load %arg4[%c2_44, %c0_45, %c0_46] : memref<5x8x128xf32, #tpu.memory_space<vmem>>, vector<1x8x128xf32>
      %61 = vector.shape_cast %60 : vector<1x8x128xf32> to vector<8x128xf32>
      %62 = vector.shape_cast %61 : vector<8x128xf32> to vector<1x8x128xf32>
      %cst_47 = arith.constant dense<0.000000e+00> : vector<1xf32>
      %63 = vector.multi_reduction <add>, %62, %cst_47 [1, 2] : vector<1x8x128xf32> to vector<1xf32>
      %64 = vector.shape_cast %63 : vector<1xf32> to vector<1x1x1xf32>
      %65 = vector.extract %64[0, 0, 0] : f32 from vector<1x1x1xf32>
      %c3_48 = arith.constant 3 : index
      %c0_49 = arith.constant 0 : index
      %c0_50 = arith.constant 0 : index
      %66 = vector.load %arg4[%c3_48, %c0_49, %c0_50] : memref<5x8x128xf32, #tpu.memory_space<vmem>>, vector<1x8x128xf32>
      %67 = vector.shape_cast %66 : vector<1x8x128xf32> to vector<8x128xf32>
      %68 = vector.shape_cast %67 : vector<8x128xf32> to vector<1x8x128xf32>
      %cst_51 = arith.constant dense<0.000000e+00> : vector<1xf32>
      %69 = vector.multi_reduction <add>, %68, %cst_51 [1, 2] : vector<1x8x128xf32> to vector<1xf32>
      %70 = vector.shape_cast %69 : vector<1xf32> to vector<1x1x1xf32>
      %71 = vector.extract %70[0, 0, 0] : f32 from vector<1x1x1xf32>
      %c4_52 = arith.constant 4 : index
      %c0_53 = arith.constant 0 : index
      %c0_54 = arith.constant 0 : index
      %72 = vector.load %arg4[%c4_52, %c0_53, %c0_54] : memref<5x8x128xf32, #tpu.memory_space<vmem>>, vector<1x8x128xf32>
      %73 = vector.shape_cast %72 : vector<1x8x128xf32> to vector<8x128xf32>
      %74 = vector.shape_cast %73 : vector<8x128xf32> to vector<1x8x128xf32>
      %cst_55 = arith.constant dense<0.000000e+00> : vector<1xf32>
      %75 = vector.multi_reduction <add>, %74, %cst_55 [1, 2] : vector<1x8x128xf32> to vector<1xf32>
      %76 = vector.shape_cast %75 : vector<1xf32> to vector<1x1x1xf32>
      %77 = vector.extract %76[0, 0, 0] : f32 from vector<1x1x1xf32>
      %cst_56 = arith.constant 2.048000e+03 : f32
      %78 = arith.divf %53, %cst_56 : f32
      %cst_57 = arith.constant 2.048000e+03 : f32
      %79 = arith.divf %59, %cst_57 : f32
      %cst_58 = arith.constant 2.048000e+03 : f32
      %80 = arith.mulf %cst_58, %78 : f32
      %81 = arith.mulf %80, %78 : f32
      %82 = arith.subf %65, %81 : f32
      %cst_59 = arith.constant 2.048000e+03 : f32
      %cst_60 = arith.constant 1.000000e+00 : f32
      %83 = arith.subf %cst_59, %cst_60 : f32
      %84 = arith.divf %82, %83 : f32
      %cst_61 = arith.constant 2.048000e+03 : f32
      %85 = arith.mulf %cst_61, %79 : f32
      %86 = arith.mulf %85, %79 : f32
      %87 = arith.subf %71, %86 : f32
      %cst_62 = arith.constant 2.048000e+03 : f32
      %cst_63 = arith.constant 1.000000e+00 : f32
      %88 = arith.subf %cst_62, %cst_63 : f32
      %89 = arith.divf %87, %88 : f32
      %cst_64 = arith.constant 2.048000e+03 : f32
      %90 = arith.divf %77, %cst_64 : f32
      %91 = arith.mulf %78, %79 : f32
      %92 = arith.subf %90, %91 : f32
      %cst_65 = arith.constant 2.000000e+00 : f32
      %93 = arith.mulf %cst_65, %92 : f32
      %94 = arith.addf %84, %89 : f32
      %95 = arith.subf %78, %79 : f32
      %96 = arith.mulf %95, %95 : f32
      %97 = arith.addf %94, %96 : f32
      %98 = arith.divf %93, %97 : f32
      %cst_66 = arith.constant 1.000000e+00 : f32
      %99 = arith.subf %cst_66, %98 : f32
      %c0_67 = arith.constant 0 : index
      %c0_68 = arith.constant 0 : index
      %100 = memref.load %arg3[%c0_67, %c0_68] : memref<1x1xf32, #tpu.memory_space<smem>>
      memref.store %99, %arg3[%c0_67, %c0_68] : memref<1x1xf32, #tpu.memory_space<smem>>
    } else {
    }
    return
  }
  func.func @transform_0(%arg0: i32) -> (i32, i32) {
    %c0_i32 = arith.constant 0 : i32
    %c0_i32_0 = arith.constant 0 : i32
    return %arg0, %c0_i32 : i32, i32
  }
  func.func @transform_1(%arg0: i32) -> (i32, i32) {
    %c0_i32 = arith.constant 0 : i32
    %c0_i32_0 = arith.constant 0 : i32
    return %arg0, %c0_i32 : i32, i32
  }
  func.func @transform_2(%arg0: i32) -> (i32, i32) {
    %c0_i32 = arith.constant 0 : i32
    %c0_i32_0 = arith.constant 0 : i32
    %c0_i32_1 = arith.constant 0 : i32
    return %c0_i32, %c0_i32_0 : i32, i32
  }
}

</mosaic_0001>

<llo_original>
// kernel: tpu_custom_call.1
$region0: #{tpu_custom_call.1}
  #allocation0 [shape = 'u32[]', space=smem, size = 0x4, offset = 0x4, fixed_abs, tag = 'smem constant byte address 0x4 - core index']
  #allocation1 [shape = 'u32[144,128]{1,0:T(1,128)}', space=vmem, size = 0x12000, scoped, tag = 'internal scratch']
  #allocation2 [shape = 'f32[5,8,128]{2,1,0:T(8,128)}', space=vmem, size = 0x5000, scoped, tag = 'scratch operand']
  %s0 = inlined_call_operand.hbm [shape: f32[16,128], index: 0, kind: input, shape index: {}]
  %s1 = inlined_call_operand.hbm [shape: f32[16,128], index: 1, kind: input, shape index: {}]
  %s2 = inlined_call_operand.hbm [shape: f32[1,1], index: 2, kind: output, shape index: {}]
  %s3 = sld [smem:[#allocation0]]
  $region34: #{tpu_custom_call.1} parent=0
    _
  %s5 = ssub.s32 1, %s3
  %s6 = scalar_select 0, %s5, %s3
  $region1: #{tpu_custom_call.1} parent=0
    #allocation3 [shape = 'u8[8192]{0}', space=vmem, size = 0x2000, scoped, tag = 'input window, operand 0, single buffered']
    #allocation4 [shape = 's32[1]{0}', space=sflag, size = 0x4, scoped, tag = 'scoped memory for tpu_custom_call.1']
    #allocation5 [shape = 's32[1]{0}', space=sflag, size = 0x4, scoped, tag = 'scoped memory for tpu_custom_call.1']
    #allocation6 [shape = 'u8[8192]{0}', space=vmem, size = 0x2000, scoped, tag = 'input window, operand 1, single buffered']
    #allocation7 [shape = 's32[1]{0}', space=sflag, size = 0x4, scoped, tag = 'scoped memory for tpu_custom_call.1']
    #allocation8 [shape = 'u8[512]{0}', space=smem, size = 0x200, scoped, tag = 'output window, operand 0, single buffered']
    %7 = vsyncpa [#allocation4], 0
    %8 = vsyncpa [#allocation7], 0
    %9 = vsyncpa [#allocation5], 0
    // Predicated region
    $region2: #{tpu_custom_call.1} parent=1 // pred_check
      _
    $region3: #{tpu_custom_call.1} parent=1 // pred_check_branch
      %11 = sbr.rel (0) target = $region5
    $region4: #{tpu_custom_call.1} parent=1 // pred_region
      %s13 = ssub.s32 256, 256
      %14 = vsyncadd [#allocation4], %s13
      %s15 = sshll.u32 [#allocation3], 4
      %s16 = int_to_ptr.vmem [resolvable:$true] %s15
      %21 = dma.hbm_to_vmem [thread:$0]  %s0, 256, %s16, [#allocation4], 128, 128, 8
    $region5: #{tpu_custom_call.1} parent=1 // pred_fallthru
      _
    // Predicated region
    $region6: #{tpu_custom_call.1} parent=1 // pred_check
      _
    $region7: #{tpu_custom_call.1} parent=1 // pred_check_branch
      %23 = sbr.rel (0) target = $region9
    $region8: #{tpu_custom_call.1} parent=1 // pred_region
      %s25 = ssub.s32 256, 256
      %26 = vsyncadd [#allocation7], %s25
      %s27 = sshll.u32 [#allocation6], 4
      %s28 = int_to_ptr.vmem [resolvable:$true] %s27
      %33 = dma.hbm_to_vmem [thread:$0]  %s1, 256, %s28, [#allocation7], 128, 128, 8
    $region9: #{tpu_custom_call.1} parent=1 // pred_fallthru
      _
    // Predicated region
    $region10: #{tpu_custom_call.1} parent=1 // pred_check
      _
    $region11: #{tpu_custom_call.1} parent=1 // pred_check_branch
      %35 = sbr.rel (0) target = $region13
    $region12: #{tpu_custom_call.1} parent=1 // pred_region
      %36 = dma.done [#allocation4], 256
    $region13: #{tpu_custom_call.1} parent=1 // pred_fallthru
      _
    // Predicated region
    $region14: #{tpu_custom_call.1} parent=1 // pred_check
      _
    $region15: #{tpu_custom_call.1} parent=1 // pred_check_branch
      %38 = sbr.rel (0) target = $region17
    $region16: #{tpu_custom_call.1} parent=1 // pred_region
      %39 = dma.done [#allocation7], 256
    $region17: #{tpu_custom_call.1} parent=1 // pred_fallthru
      _
    %p40 = scmp.eq.s32.totalorder 0, 0
    // Predicated region
    $region18: #{tpu_custom_call.1} parent=1 // pred_check
      %p41 = pneg %p40
    $region19: #{tpu_custom_call.1} parent=1 // pred_check_branch
      %43 = sbr.rel (%p41) target = $region21
    $region20: #{tpu_custom_call.1} parent=1 // pred_region
      %44 = vst [vmem:[#allocation2] sm:$0xff] 0.0
      %45 = vst [vmem:[#allocation2 + $0x8] sm:$0xff] 0.0
      %46 = vst [vmem:[#allocation2 + $0x10] sm:$0xff] 0.0
      %47 = vst [vmem:[#allocation2 + $0x18] sm:$0xff] 0.0
      %48 = vst [vmem:[#allocation2 + $0x20] sm:$0xff] 0.0
    $region21: #{tpu_custom_call.1} parent=1 // pred_fallthru
      _
    %v49 = vld [vmem:[#allocation3] sm:$0xff]
    %v50 = vld [vmem:[#allocation3 + $0x8] sm:$0xff]
    %v51 = vld [vmem:[#allocation6] sm:$0xff]
    %v52 = vld [vmem:[#allocation6 + $0x8] sm:$0xff]
    %v53 = vld [vmem:[#allocation2] sm:$0xff]
    %v54 = vadd.f32 %v49, %v50
    %v55 = vadd.f32 %v53, %v54
    %56 = vst [vmem:[#allocation2] sm:$0xff] %v55
    %s57 = scalar_lea.vmem [#allocation2], 8
    %v58 = vld [vmem:[%s57] sm:$0xff]
    %v59 = vadd.f32 %v51, %v52
    %v60 = vadd.f32 %v58, %v59
    %61 = vst [vmem:[%s57] sm:$0xff] %v60
    %s62 = scalar_lea.vmem [#allocation2], 16
    %v63 = vld [vmem:[%s62] sm:$0xff]
    %v64 = vmul.f32 %v49, %v49
    %v65 = vmul.f32 %v50, %v50
    %v66 = vadd.f32 %v64, %v65
    %v67 = vadd.f32 %v63, %v66
    %68 = vst [vmem:[%s62] sm:$0xff] %v67
    %s69 = scalar_lea.vmem [#allocation2], 24
    %v70 = vld [vmem:[%s69] sm:$0xff]
    %v71 = vmul.f32 %v51, %v51
    %v72 = vmul.f32 %v52, %v52
    %v73 = vadd.f32 %v71, %v72
    %v74 = vadd.f32 %v70, %v73
    %75 = vst [vmem:[%s69] sm:$0xff] %v74
    %s76 = scalar_lea.vmem [#allocation2], 32
    %v77 = vld [vmem:[%s76] sm:$0xff]
    %v78 = vmul.f32 %v49, %v51
    %v79 = vmul.f32 %v50, %v52
    %v80 = vadd.f32 %v78, %v79
    %v81 = vadd.f32 %v77, %v80
    %82 = vst [vmem:[%s76] sm:$0xff] %v81
    // Predicated region
    $region22: #{tpu_custom_call.1} parent=1 // pred_check
      %p83 = pneg %p40
    $region23: #{tpu_custom_call.1} parent=1 // pred_check_branch
      %85 = sbr.rel (%p83) target = $region25
    $region24: #{tpu_custom_call.1} parent=1 // pred_region
      %v86 = vld [vmem:[#allocation2] sm:$0xff]
      %87 = vadd.xlane.f32.xlu0 %v86
      %v88 = vpop.xlane.xlu0 %87
      %v89 = vrot.slane %v88, 4
      %v90 = vadd.f32 %v88, %v89
      %v91 = vrot.slane %v90, 2
      %v92 = vadd.f32 %v90, %v91
      %v93 = vrot.slane %v92, 1
      %v94 = vadd.f32 %v92, %v93
      %s95 = vtos %v94
      %v96 = vld [vmem:[%s57] sm:$0xff]
      %97 = vadd.xlane.f32.xlu0 %v96
      %v98 = vpop.xlane.xlu0 %97
      %v99 = vrot.slane %v98, 4
      %v100 = vadd.f32 %v98, %v99
      %v101 = vrot.slane %v100, 2
      %v102 = vadd.f32 %v100, %v101
      %v103 = vrot.slane %v102, 1
      %v104 = vadd.f32 %v102, %v103
      %s105 = vtos %v104
      %v106 = vld [vmem:[%s62] sm:$0xff]
      %107 = vadd.xlane.f32.xlu0 %v106
      %v108 = vpop.xlane.xlu0 %107
      %v109 = vrot.slane %v108, 4
      %v110 = vadd.f32 %v108, %v109
      %v111 = vrot.slane %v110, 2
      %v112 = vadd.f32 %v110, %v111
      %v113 = vrot.slane %v112, 1
      %v114 = vadd.f32 %v112, %v113
      %s115 = vtos %v114
      %v116 = vld [vmem:[%s69] sm:$0xff]
      %117 = vadd.xlane.f32.xlu0 %v116
      %v118 = vpop.xlane.xlu0 %117
      %v119 = vrot.slane %v118, 4
      %v120 = vadd.f32 %v118, %v119
      %v121 = vrot.slane %v120, 2
      %v122 = vadd.f32 %v120, %v121
      %v123 = vrot.slane %v122, 1
      %v124 = vadd.f32 %v122, %v123
      %s125 = vtos %v124
      %v126 = vld [vmem:[%s76] sm:$0xff]
      %127 = vadd.xlane.f32.xlu0 %v126
      %v128 = vpop.xlane.xlu0 %127
      %v129 = vrot.slane %v128, 4
      %v130 = vadd.f32 %v128, %v129
      %v131 = vrot.slane %v130, 2
      %v132 = vadd.f32 %v130, %v131
      %v133 = vrot.slane %v132, 1
      %v134 = vadd.f32 %v132, %v133
      %s135 = vtos %v134
      %v136 = vrcp.pop 2048.0
      %s137 = vtos %v136
      %s138 = smul.f32 %s95, %s137
      %v139 = vrcp.pop 2048.0
      %s140 = vtos %v139
      %s141 = smul.f32 %s105, %s140
      %s142 = smul.f32 %s138, 2048.0
      %s143 = smul.f32 %s142, %s138
      %s144 = ssub.f32 %s115, %s143
      %v145 = vrcp.pop 2047.0
      %s146 = vtos %v145
      %s147 = smul.f32 %s144, %s146
      %s148 = smul.f32 %s141, 2048.0
      %s149 = smul.f32 %s148, %s141
      %s150 = ssub.f32 %s125, %s149
      %v151 = vrcp.pop 2047.0
      %s152 = vtos %v151
      %s153 = smul.f32 %s150, %s152
      %v154 = vrcp.pop 2048.0
      %s155 = vtos %v154
      %s156 = smul.f32 %s135, %s155
      %s157 = smul.f32 %s138, %s141
      %s158 = ssub.f32 %s156, %s157
      %s159 = smul.f32 %s158, 2.0
      %s160 = sadd.f32 %s147, %s153
      %s161 = ssub.f32 %s138, %s141
      %s162 = smul.f32 %s161, %s161
      %s163 = sadd.f32 %s160, %s162
      %v164 = vstv %s163
      %v165 = vrcp.pop %v164
      %s166 = vtos %v165
      %s167 = smul.f32 %s159, %s166
      %s168 = ssub.f32 1.0, %s167
      %s169 = scalar_lea.smem [#allocation8], 0
      %170 = sst [smem:[%s169]] %s168
    $region25: #{tpu_custom_call.1} parent=1 // pred_fallthru
      _
    // Predicated region
    $region26: #{tpu_custom_call.1} parent=1 // pred_check
      _
    $region27: #{tpu_custom_call.1} parent=1 // pred_check_branch
      %172 = sbr.rel (0) target = $region29
    $region28: #{tpu_custom_call.1} parent=1 // pred_region
      %s174 = ssub.s32 16, 16
      %175 = vsyncadd [#allocation5], %s174
      %178 = dma.smem_to_hbm [#allocation8], 16, %s2, [#allocation5]
    $region29: #{tpu_custom_call.1} parent=1 // pred_fallthru
      _
    // Predicated region
    $region30: #{tpu_custom_call.1} parent=1 // pred_check
      _
    $region31: #{tpu_custom_call.1} parent=1 // pred_check_branch
      %180 = sbr.rel (0) target = $region33
    $region32: #{tpu_custom_call.1} parent=1 // pred_region
      %181 = dma.done [#allocation5], 16
    $region33: #{tpu_custom_call.1} parent=1 // pred_fallthru
      _
    %182 = sfence
    %183 = vsyncpa [#allocation4], 1
    %184 = vsyncpa [#allocation7], 1
    %185 = vsyncpa [#allocation5], 1

</llo_original>
